<compile_context>
chip_gen: v6e
topology: v6e:2x2x1
jax: 0.10.0
libtpu: 0.0.40
codegen_flags: <defaults>
</compile_context>

<pallas_src>
import jax
import jax.numpy as jnp
from jax.experimental import pallas as pl
from jax.experimental.pallas import tpu as pltpu


def _upsample_sc_kernel(x_ref, w_ref, b_ref, s_ref, fm_ref, o_ref):
    # x_ref : (1, Cin, P)      one NCHW image, spatial flattened (P = H*W)
    # w_ref : (Cout, Cin)      1x1 transposed-conv weight (transposed)
    # b_ref : (Cout, 1)        bias
    # s_ref : (P, Q)           constant 0/1 scatter matrix, Q = Hout*Wout
    # fm_ref: (1, Cf, Q)       skip-connection feature map, spatial flattened
    # o_ref : (1, Cout+Cf, Q)  fused output (conv channels ++ feature channels)
    cout = w_ref.shape[0]

    # 1x1 transposed conv == per-pixel channel matmul (MXU, f32 accumulation).
    y = jnp.dot(w_ref[...], x_ref[0], preferred_element_type=jnp.float32)   # (Cout, P)

    # Stride-2 scatter into the flattened (Hout, Wout) grid (exact: one-hot cols).
    scat = jnp.dot(y, s_ref[...], preferred_element_type=jnp.float32)       # (Cout, Q)

    # Bias everywhere: hit positions get conv+bias, all others get bias only.
    o_ref[0, :cout, :] = (scat + b_ref[...]).astype(o_ref.dtype)

    # Fused channel concat: copy the skip feature map into the tail channels.
    o_ref[0, cout:, :] = fm_ref[0].astype(o_ref.dtype)


def my_upsampling_sc(x, feature_map, weight, bias, stride=2):
    """Forward pass of My_UpSampling_SC.

    x:           (N, Cin, H, W)        NCHW
    feature_map: (N, Cf, Hout, Wout)   NCHW, Hout=(H-1)*stride+1, same for W
    weight:      (Cin, Cout, 1, 1)     ConvTranspose2d weight layout
    bias:        (Cout,)
    returns:     (N, Cout + Cf, Hout, Wout)
    """
    N, Cin, H, W = x.shape
    Cout = weight.shape[1]
    Cf = feature_map.shape[1]
    Hout = (H - 1) * stride + 1
    Wout = (W - 1) * stride + 1
    assert feature_map.shape == (N, Cf, Hout, Wout), feature_map.shape
    P = H * W
    Q = Hout * Wout

    # Free (metadata-only) reshapes: NCHW arrays are already contiguous this way.
    x2 = x.reshape(N, Cin, P)
    fm2 = feature_map.reshape(N, Cf, Q)

    # Tiny parameter re-layouts.
    w2 = weight.reshape(Cin, Cout).T.astype(x.dtype)     # (Cout, Cin)
    b2 = bias.reshape(Cout, 1).astype(x.dtype)           # (Cout, 1)

    # Constant 0/1 scatter operator: input pixel p=(i,j) -> flat output position
    # q = (stride*i)*Wout + stride*j. Every column has at most a single 1.
    p = jnp.arange(P, dtype=jnp.int32)
    q_tgt = (stride * (p // W)) * Wout + stride * (p % W)
    scatter = (q_tgt[:, None] == jnp.arange(Q, dtype=jnp.int32)[None, :]).astype(x.dtype)

    out2 = pl.pallas_call(
        _upsample_sc_kernel,
        out_shape=jax.ShapeDtypeStruct((N, Cout + Cf, Q), x.dtype),
        grid=(N,),
        in_specs=[
            pl.BlockSpec((1, Cin, P), lambda n: (n, 0, 0)),        # x (per image)
            pl.BlockSpec((Cout, Cin), lambda n: (0, 0)),           # weight (resident)
            pl.BlockSpec((Cout, 1), lambda n: (0, 0)),             # bias (resident)
            pl.BlockSpec((P, Q), lambda n: (0, 0)),                # scatter (resident)
            pl.BlockSpec((1, Cf, Q), lambda n: (n, 0, 0)),         # feature map (per image)
        ],
        out_specs=pl.BlockSpec((1, Cout + Cf, Q), lambda n: (n, 0, 0)),
        compiler_params=pltpu.CompilerParams(
            dimension_semantics=("parallel",)),
    )(x2, w2, b2, scatter, fm2)

    # Free reshape back to NCHW 4-D.
    return out2.reshape(N, Cout + Cf, Hout, Wout)


if __name__ == "__main__":
    key = jax.random.PRNGKey(0)
    k_x, k_f, k_w, k_b = jax.random.split(key, 4)

    N, Cin, H, W = 2, 4, 16, 16
    Cout, Cf = 8, 4
    stride = 2
    Hout = (H - 1) * stride + 1
    Wout = (W - 1) * stride + 1

    x = jax.random.normal(k_x, (N, Cin, H, W), dtype=jnp.float32)
    feature_map = jax.random.normal(k_f, (N, Cf, Hout, Wout), dtype=jnp.float32)
    # ConvTranspose2d parameters: weight (Cin, Cout, 1, 1), bias (Cout,)
    weight = jax.random.normal(k_w, (Cin, Cout, 1, 1), dtype=jnp.float32) * 0.1
    bias = jax.random.normal(k_b, (Cout,), dtype=jnp.float32) * 0.1

    out = my_upsampling_sc(x, feature_map, weight, bias, stride=stride)
    out = jax.block_until_ready(out)

    # Reference in plain JAX.
    y_ref = jnp.einsum("nchw,co->nohw", x, weight.reshape(Cin, Cout),
                       precision=jax.lax.Precision.HIGHEST)
    y_ref = y_ref + bias[None, :, None, None]
    conv_ref = jnp.broadcast_to(
        bias[None, :, None, None], (N, Cout, Hout, Wout)
    ).at[:, :, ::stride, ::stride].set(y_ref)
    ref = jnp.concatenate([conv_ref, feature_map], axis=1)

    assert out.shape == (N, Cout + Cf, Hout, Wout), out.shape
    assert jnp.allclose(out, ref, atol=1e-4, rtol=1e-4)
    print("KERNEL_OK")
</pallas_src>

<mosaic_0001>
module attributes {stable_mosaic.version = 11 : i64} {
  func.func @_upsample_sc_kernel(%arg0: i32, %arg1: memref<1x4x256xf32, #tpu.memory_space<vmem>>, %arg2: memref<8x4xf32, #tpu.memory_space<vmem>>, %arg3: memref<8x1xf32, #tpu.memory_space<vmem>>, %arg4: memref<256x961xf32, #tpu.memory_space<vmem>>, %arg5: memref<1x4x961xf32, #tpu.memory_space<vmem>>, %arg6: memref<1x12x961xf32, #tpu.memory_space<vmem>>) attributes {dimension_semantics = [#tpu.dimension_semantics<parallel>], iteration_bounds = array<i64: 2>, scalar_prefetch = 0 : i64, scratch_operands = 0 : i64, tpu.core_type = #tpu.core_type<tc>, window_params = [{transform_indices = @transform_0, window_bounds = array<i64: 1, 4, 256>}, {pipeline_mode = #tpu.pipeline_mode<synchronous>, transform_indices = @transform_1, window_bounds = array<i64: 8, 4>}, {pipeline_mode = #tpu.pipeline_mode<synchronous>, transform_indices = @transform_2, window_bounds = array<i64: 8, 1>}, {pipeline_mode = #tpu.pipeline_mode<synchronous>, transform_indices = @transform_3, window_bounds = array<i64: 256, 961>}, {transform_indices = @transform_4, window_bounds = array<i64: 1, 4, 961>}, {transform_indices = @transform_5, window_bounds = array<i64: 1, 12, 961>}]} {
    %c0 = arith.constant 0 : index
    %c0_0 = arith.constant 0 : index
    %0 = vector.load %arg2[%c0, %c0_0] : memref<8x4xf32, #tpu.memory_space<vmem>>, vector<8x4xf32>
    %c0_1 = arith.constant 0 : index
    %c0_2 = arith.constant 0 : index
    %c0_3 = arith.constant 0 : index
    %1 = vector.load %arg1[%c0_1, %c0_2, %c0_3] : memref<1x4x256xf32, #tpu.memory_space<vmem>>, vector<1x4x256xf32>
    %2 = vector.shape_cast %1 : vector<1x4x256xf32> to vector<4x256xf32>
    %cst = arith.constant dense<0.000000e+00> : vector<8x256xf32>
    %3 = tpu.matmul %0, %2, %cst {dimension_numbers = #tpu.dot_dimension_numbers<[1], [0], [0], [1], [0, 0, 1, 1], [], []>} : vector<8x4xf32>, vector<4x256xf32>, vector<8x256xf32> -> vector<8x256xf32>
    %c0_4 = arith.constant 0 : index
    %c0_5 = arith.constant 0 : index
    %4 = vector.load %arg4[%c0_4, %c0_5] : memref<256x961xf32, #tpu.memory_space<vmem>>, vector<256x961xf32>
    %cst_6 = arith.constant dense<0.000000e+00> : vector<8x961xf32>
    %5 = tpu.matmul %3, %4, %cst_6 {dimension_numbers = #tpu.dot_dimension_numbers<[1], [0], [0], [1], [0, 0, 1, 1], [], []>} : vector<8x256xf32>, vector<256x961xf32>, vector<8x961xf32> -> vector<8x961xf32>
    %c0_7 = arith.constant 0 : index
    %c0_8 = arith.constant 0 : index
    %6 = vector.load %arg3[%c0_7, %c0_8] : memref<8x1xf32, #tpu.memory_space<vmem>>, vector<8x1xf32>
    %7 = vector.broadcast %6 : vector<8x1xf32> to vector<8x961xf32>
    %8 = arith.addf %5, %7 : vector<8x961xf32>
    %c0_9 = arith.constant 0 : index
    %c0_10 = arith.constant 0 : index
    %c0_11 = arith.constant 0 : index
    %9 = vector.load %arg6[%c0_9, %c0_10, %c0_11] : memref<1x12x961xf32, #tpu.memory_space<vmem>>, vector<1x8x961xf32>
    %10 = vector.shape_cast %9 : vector<1x8x961xf32> to vector<8x961xf32>
    %11 = vector.shape_cast %8 : vector<8x961xf32> to vector<1x8x961xf32>
    tpu.vector_store %arg6[%c0_9, %c0_10, %c0_11], %11 {strides = array<i32>} : memref<1x12x961xf32, #tpu.memory_space<vmem>>, vector<1x8x961xf32>,
    %c0_12 = arith.constant 0 : index
    %c0_13 = arith.constant 0 : index
    %c0_14 = arith.constant 0 : index
    %12 = vector.load %arg5[%c0_12, %c0_13, %c0_14] : memref<1x4x961xf32, #tpu.memory_space<vmem>>, vector<1x4x961xf32>
    %13 = vector.shape_cast %12 : vector<1x4x961xf32> to vector<4x961xf32>
    %c0_15 = arith.constant 0 : index
    %c8 = arith.constant 8 : index
    %c0_16 = arith.constant 0 : index
    %14 = vector.load %arg6[%c0_15, %c8, %c0_16] : memref<1x12x961xf32, #tpu.memory_space<vmem>>, vector<1x4x961xf32>
    %15 = vector.shape_cast %14 : vector<1x4x961xf32> to vector<4x961xf32>
    %16 = vector.shape_cast %13 : vector<4x961xf32> to vector<1x4x961xf32>
    tpu.vector_store %arg6[%c0_15, %c8, %c0_16], %16 {strides = array<i32>} : memref<1x12x961xf32, #tpu.memory_space<vmem>>, vector<1x4x961xf32>,
    return
  }
  func.func @transform_0(%arg0: i32) -> (i32, i32, i32) {
    %c0_i32 = arith.constant 0 : i32
    %c0_i32_0 = arith.constant 0 : i32
    %c0_i32_1 = arith.constant 0 : i32
    return %arg0, %c0_i32, %c0_i32_0 : i32, i32, i32
  }
  func.func @transform_1(%arg0: i32) -> (i32, i32) {
    %c0_i32 = arith.constant 0 : i32
    %c0_i32_0 = arith.constant 0 : i32
    %c0_i32_1 = arith.constant 0 : i32
    return %c0_i32, %c0_i32_0 : i32, i32
  }
  func.func @transform_2(%arg0: i32) -> (i32, i32) {
    %c0_i32 = arith.constant 0 : i32
    %c0_i32_0 = arith.constant 0 : i32
    %c0_i32_1 = arith.constant 0 : i32
    return %c0_i32, %c0_i32_0 : i32, i32
  }
  func.func @transform_3(%arg0: i32) -> (i32, i32) {
    %c0_i32 = arith.constant 0 : i32
    %c0_i32_0 = arith.constant 0 : i32
    %c0_i32_1 = arith.constant 0 : i32
    return %c0_i32, %c0_i32_0 : i32, i32
  }
  func.func @transform_4(%arg0: i32) -> (i32, i32, i32) {
    %c0_i32 = arith.constant 0 : i32
    %c0_i32_0 = arith.constant 0 : i32
    %c0_i32_1 = arith.constant 0 : i32
    return %arg0, %c0_i32, %c0_i32_0 : i32, i32, i32
  }
  func.func @transform_5(%arg0: i32) -> (i32, i32, i32) {
    %c0_i32 = arith.constant 0 : i32
    %c0_i32_0 = arith.constant 0 : i32
    %c0_i32_1 = arith.constant 0 : i32
    return %arg0, %c0_i32, %c0_i32_0 : i32, i32, i32
  }
}

</mosaic_0001>

<llo_original>
// kernel: tpu_custom_call.1
$region0: #{tpu_custom_call.1}
  #allocation0 [shape = 'u32[]', space=smem, size = 0x4, offset = 0x4, fixed_abs, tag = 'smem constant byte address 0x4 - core index']
  #allocation1 [shape = 'u32[144,128]{1,0:T(1,128)}', space=vmem, size = 0x12000, scoped, tag = 'internal scratch']
  %s0 = inlined_call_operand.vmem [shape: f32[2,4,256], index: 0, kind: input, shape index: {}]
  %s1 = inlined_call_operand.vmem [shape: f32[8,4], index: 1, kind: input, shape index: {}]
  %s2 = inlined_call_operand.vmem [shape: f32[8,1], index: 2, kind: input, shape index: {}]
  %s3 = inlined_call_operand.vmem [shape: f32[256,961], index: 3, kind: input, shape index: {}]
  %s4 = inlined_call_operand.vmem [shape: f32[2,4,961], index: 4, kind: input, shape index: {}]
  %s5 = inlined_call_operand.vmem [shape: f32[2,12,961], index: 5, kind: output, shape index: {}]
  %s6 = sld [smem:[#allocation0]]
  $region53: #{tpu_custom_call.1} parent=0
    _
  %s8 = ssub.s32 1, %s6
  %s9 = scalar_select 0, %s8, %s6
  loop: start=0, step=1, limit=4
  $region2: #{tpu_custom_call.1} parent=0 // loop_pre_header
    _
  $region3: #{tpu_custom_call.1} parent=0 // loop_header
    %s11 = sphi 0, %s15
    %p12 = scmp.ge.s32.totalorder %s11, 4
    %s21 = sphi 0, %s23
    %s24 = sphi 0, %s21
    %s25 = sphi 0, %s24
    %s41 = sphi 0, %s25
    %s45 = sphi 0, %s45
    %s47 = sphi 0, %s45
    %s48 = sphi 0, %s47
    %s62 = sphi 0, %s48
    %s66 = sphi 0, %s66
    %s68 = sphi 0, %s66
    %s69 = sphi 0, %s68
    %s83 = sphi 0, %s69
    %s87 = sphi 0, %s87
    %s89 = sphi 0, %s87
    %s90 = sphi 0, %s89
    %s104 = sphi 0, %s90
    %s110 = sphi 0, %s112
    %s113 = sphi 0, %s110
    %s114 = sphi 0, %s113
    %s130 = sphi 0, %s114
    %s136 = sphi 0, %s138
    %s139 = sphi 0, %s136
    %s140 = sphi 0, %s139
    %s156 = sphi 0, %s140
  $region4: #{tpu_custom_call.1} parent=0 // loop_header_branch
    %14 = sbr.rel (%p12) target = $region8
  $region5: #{tpu_custom_call.1} parent=0 // loop_body
    %s16 = ssub.s32 %s11, 1
    %s17 = ssub.s32 %s11, 2
    %s18 = sadd.s32 %s11, 1
    %s19 = ssub.s32 %s11, %s18
    %p20 = scmp.eq.s32.totalorder %s19, 0
    %s22 = sadd.s32 %s21, 1
    %s23 = scalar_select %p20, %s21, %s22
    %p26 = pneg %p20
    %p27 = scmp.eq.s32.totalorder %s11, 1
    %p28 = por %p26, %p27
    %p29 = scmp.ne.s32.totalorder %s21, %s24
    %p30 = scmp.eq.s32.totalorder %s11, 0
    %p31 = por %p29, %p30
    %p32 = scmp.ne.s32.totalorder %s21, %s24
    %p33 = scmp.eq.s32.totalorder %s16, 1
    %p34 = por %p32, %p33
    %p35 = scmp.ne.s32.totalorder %s24, %s25
    %p36 = scmp.eq.s32.totalorder %s16, 0
    %p37 = por %p35, %p36
    %p38 = scmp.ne.s32.totalorder %s24, %s25
    %p39 = scmp.eq.s32.totalorder %s17, 1
    %p40 = por %p38, %p39
    %p42 = scmp.ne.s32.totalorder %s25, %s41
    %p43 = scmp.eq.s32.totalorder %s17, 0
    %p44 = por %p42, %p43
    %s46 = sadd.s32 %s45, 1
    %p49 = scmp.eq.s32.totalorder %s11, 1
    %p50 = scmp.ne.s32.totalorder %s45, %s47
    %p51 = scmp.eq.s32.totalorder %s11, 0
    %p52 = por %p50, %p51
    %p53 = scmp.ne.s32.totalorder %s45, %s47
    %p54 = scmp.eq.s32.totalorder %s16, 1
    %p55 = por %p53, %p54
    %p56 = scmp.ne.s32.totalorder %s47, %s48
    %p57 = scmp.eq.s32.totalorder %s16, 0
    %p58 = por %p56, %p57
    %p59 = scmp.ne.s32.totalorder %s47, %s48
    %p60 = scmp.eq.s32.totalorder %s17, 1
    %p61 = por %p59, %p60
    %p63 = scmp.ne.s32.totalorder %s48, %s62
    %p64 = scmp.eq.s32.totalorder %s17, 0
    %p65 = por %p63, %p64
    %s67 = sadd.s32 %s66, 1
    %p70 = scmp.eq.s32.totalorder %s11, 1
    %p71 = scmp.ne.s32.totalorder %s66, %s68
    %p72 = scmp.eq.s32.totalorder %s11, 0
    %p73 = por %p71, %p72
    %p74 = scmp.ne.s32.totalorder %s66, %s68
    %p75 = scmp.eq.s32.totalorder %s16, 1
    %p76 = por %p74, %p75
    %p77 = scmp.ne.s32.totalorder %s68, %s69
    %p78 = scmp.eq.s32.totalorder %s16, 0
    %p79 = por %p77, %p78
    %p80 = scmp.ne.s32.totalorder %s68, %s69
    %p81 = scmp.eq.s32.totalorder %s17, 1
    %p82 = por %p80, %p81
    %p84 = scmp.ne.s32.totalorder %s69, %s83
    %p85 = scmp.eq.s32.totalorder %s17, 0
    %p86 = por %p84, %p85
    %s88 = sadd.s32 %s87, 1
    %p91 = scmp.eq.s32.totalorder %s11, 1
    %p92 = scmp.ne.s32.totalorder %s87, %s89
    %p93 = scmp.eq.s32.totalorder %s11, 0
    %p94 = por %p92, %p93
    %p95 = scmp.ne.s32.totalorder %s87, %s89
    %p96 = scmp.eq.s32.totalorder %s16, 1
    %p97 = por %p95, %p96
    %p98 = scmp.ne.s32.totalorder %s89, %s90
    %p99 = scmp.eq.s32.totalorder %s16, 0
    %p100 = por %p98, %p99
    %p101 = scmp.ne.s32.totalorder %s89, %s90
    %p102 = scmp.eq.s32.totalorder %s17, 1
    %p103 = por %p101, %p102
    %p105 = scmp.ne.s32.totalorder %s90, %s104
    %p106 = scmp.eq.s32.totalorder %s17, 0
    %p107 = por %p105, %p106
    %s108 = ssub.s32 %s11, %s18
    %p109 = scmp.eq.s32.totalorder %s108, 0
    %s111 = sadd.s32 %s110, 1
    %s112 = scalar_select %p109, %s110, %s111
    %p115 = pneg %p109
    %p116 = scmp.eq.s32.totalorder %s11, 1
    %p117 = por %p115, %p116
    %p118 = scmp.ne.s32.totalorder %s110, %s113
    %p119 = scmp.eq.s32.totalorder %s11, 0
    %p120 = por %p118, %p119
    %p121 = scmp.ne.s32.totalorder %s110, %s113
    %p122 = scmp.eq.s32.totalorder %s16, 1
    %p123 = por %p121, %p122
    %p124 = scmp.ne.s32.totalorder %s113, %s114
    %p125 = scmp.eq.s32.totalorder %s16, 0
    %p126 = por %p124, %p125
    %p127 = scmp.ne.s32.totalorder %s113, %s114
    %p128 = scmp.eq.s32.totalorder %s17, 1
    %p129 = por %p127, %p128
    %p131 = scmp.ne.s32.totalorder %s114, %s130
    %p132 = scmp.eq.s32.totalorder %s17, 0
    %p133 = por %p131, %p132
    %s134 = ssub.s32 %s11, %s18
    %p135 = scmp.eq.s32.totalorder %s134, 0
    %s137 = sadd.s32 %s136, 1
    %s138 = scalar_select %p135, %s136, %s137
    %p141 = pneg %p135
    %p142 = scmp.eq.s32.totalorder %s11, 1
    %p143 = por %p141, %p142
    %p144 = scmp.ne.s32.totalorder %s136, %s139
    %p145 = scmp.eq.s32.totalorder %s11, 0
    %p146 = por %p144, %p145
    %p147 = scmp.ne.s32.totalorder %s136, %s139
    %p148 = scmp.eq.s32.totalorder %s16, 1
    %p149 = por %p147, %p148
    %p150 = scmp.ne.s32.totalorder %s139, %s140
    %p151 = scmp.eq.s32.totalorder %s16, 0
    %p152 = por %p150, %p151
    %p153 = scmp.ne.s32.totalorder %s139, %s140
    %p154 = scmp.eq.s32.totalorder %s17, 1
    %p155 = por %p153, %p154
    %p157 = scmp.ne.s32.totalorder %s140, %s156
    %p158 = scmp.eq.s32.totalorder %s17, 0
    %p159 = por %p157, %p158
    %p160 = scmp.le.s32.totalorder 1, %s11
    %p161 = scmp.lt.s32.totalorder %s11, 3
    %p162 = pnand %p160, %p161
    %p163 = pneg %p162
    // Predicated region
    $region9: #{tpu_custom_call.1} parent=5 // pred_check
      _
    $region10: #{tpu_custom_call.1} parent=5 // pred_check_branch
      %165 = sbr.rel (%p162) target = $region12
    $region11: #{tpu_custom_call.1} parent=5 // pred_region
      %s166 = ssub.s32 %s11, 1
      // Predicated region
      $region13: #{tpu_custom_call.1} parent=11 // pred_check
        %p167 = pneg %p58
      $region14: #{tpu_custom_call.1} parent=11 // pred_check_branch
        %169 = sbr.rel (%p167) target = $region16
      $region15: #{tpu_custom_call.1} parent=11 // pred_region
        _
      $region16: #{tpu_custom_call.1} parent=11 // pred_fallthru
        _
      // Predicated region
      $region17: #{tpu_custom_call.1} parent=11 // pred_check
        %p170 = pneg %p79
      $region18: #{tpu_custom_call.1} parent=11 // pred_check_branch
        %172 = sbr.rel (%p170) target = $region20
      $region19: #{tpu_custom_call.1} parent=11 // pred_region
        _
      $region20: #{tpu_custom_call.1} parent=11 // pred_fallthru
        _
      // Predicated region
      $region21: #{tpu_custom_call.1} parent=11 // pred_check
        %p173 = pneg %p100
      $region22: #{tpu_custom_call.1} parent=11 // pred_check_branch
        %175 = sbr.rel (%p173) target = $region24
      $region23: #{tpu_custom_call.1} parent=11 // pred_region
        _
      $region24: #{tpu_custom_call.1} parent=11 // pred_fallthru
        _
    $region12: #{tpu_custom_call.1} parent=5 // pred_fallthru
      _
    %p176 = scmp.lt.s32.totalorder %s11, 2
    // Predicated region
    $region25: #{tpu_custom_call.1} parent=5 // pred_check
      %p177 = pneg %p176
    $region26: #{tpu_custom_call.1} parent=5 // pred_check_branch
      %179 = sbr.rel (%p177) target = $region28
    $region27: #{tpu_custom_call.1} parent=5 // pred_region
      // Predicated region
      $region29: #{tpu_custom_call.1} parent=27 // pred_check
        %p180 = pneg %p31
      $region30: #{tpu_custom_call.1} parent=27 // pred_check_branch
        %182 = sbr.rel (%p180) target = $region32
      $region31: #{tpu_custom_call.1} parent=27 // pred_region
        %p183 = scmp.lt.s32.totalorder %s11, 1
        %s184 = scalar_select %p183, %s11, 1
        %s185 = smul.addr %s184, 2
        %s186 = smul.addr %s185, 4
        %s187 = scalar_lea.vmem %s0, %s186
      $region32: #{tpu_custom_call.1} parent=27 // pred_fallthru
        _
      // Predicated region
      $region33: #{tpu_custom_call.1} parent=27 // pred_check
        %p188 = pneg %p120
      $region34: #{tpu_custom_call.1} parent=27 // pred_check_branch
        %190 = sbr.rel (%p188) target = $region36
      $region35: #{tpu_custom_call.1} parent=27 // pred_region
        %p191 = scmp.lt.s32.totalorder %s11, 1
        %s192 = scalar_select %p191, %s11, 1
        %s193 = smul.addr %s192, 8
        %s194 = smul.addr %s193, 4
        %s195 = scalar_lea.vmem %s4, %s194
      $region36: #{tpu_custom_call.1} parent=27 // pred_fallthru
        _
    $region28: #{tpu_custom_call.1} parent=5 // pred_fallthru
      _
    %p196 = scmp.le.s32.totalorder 1, %s11
    %p197 = scmp.lt.s32.totalorder %s11, 3
    %p198 = pnand %p196, %p197
    %p199 = pneg %p198
    // Predicated region
    $region37: #{tpu_custom_call.1} parent=5 // pred_check
      _
    $region38: #{tpu_custom_call.1} parent=5 // pred_check_branch
      %201 = sbr.rel (%p198) target = $region40
    $region39: #{tpu_custom_call.1} parent=5 // pred_region
      %s202 = ssub.s32 %s11, 1
      %p203 = scmp.lt.s32.totalorder %s16, 1
      %s204 = scalar_select %p203, %s16, 1
      %s205 = smul.addr %s204, 2
      %s206 = smul.addr %s205, 4
      %s207 = scalar_lea.vmem %s0, %s206
      %p208 = pneg %p37
      %p209 = pneg %p34
      %p210 = pneg %p58
      %p211 = pneg %p55
      %p212 = pneg %p79
      %p213 = pneg %p76
      %p214 = pneg %p100
      %p215 = pneg %p97
      %p216 = scmp.lt.s32.totalorder %s16, 1
      %s217 = scalar_select %p216, %s16, 1
      %s218 = smul.addr %s217, 8
      %s219 = smul.addr %s218, 4
      %s220 = scalar_lea.vmem %s4, %s219
      %p221 = pneg %p126
      %p222 = pneg %p123
      %p223 = pneg %p152
      %p224 = pneg %p149
      %p225 = scmp.lt.s32.totalorder %s16, 1
      %s226 = scalar_select %p225, %s16, 1
      %s227 = smul.addr %s226, 16
      %s228 = smul.addr %s227, 8
      %s229 = scalar_lea.vmem %s5, %s228
      %p230 = scmp.lt.s32.totalorder %s16, 1
      %s231 = scalar_select %p230, %s16, 1
      %s232 = smul.addr %s231, 2
      %s233 = smul.addr %s232, 4
      %s234 = scalar_lea.vmem %s0, %s233
      %p235 = scmp.lt.s32.totalorder %s16, 1
      %s236 = scalar_select %p235, %s16, 1
      %s237 = smul.addr %s236, 8
      %s238 = smul.addr %s237, 4
      %s239 = scalar_lea.vmem %s4, %s238
      %p240 = scmp.lt.s32.totalorder %s16, 1
      %s241 = scalar_select %p240, %s16, 1
      %s242 = smul.addr %s241, 16
      %s243 = smul.addr %s242, 8
      %s244 = scalar_lea.vmem %s5, %s243
      %v245 = vld [vmem:[%s1] sm:$0xff]
      %v246 = vld [vmem:[%s234] sm:$0xff]
      %v248 = vcombine.high %v246, %v246
      %vm249 = vcmask 31744
      %v251 = vsel %vm249, %v245, 0
      %vm253 = vcmask 1043456
      %v254 = vsel %vm253, %v246, 0
      %v256 = vsel %vm253, %v248, 0
      %258 = vmatprep.subr.mxu0 0.0
      %259 = vmatpush1.msra.mxu0 0.0
      %260 = vmatprep.subr.mxu0 0.0
      %261 = vmatpush1.msra.mxu0 0.0
      %262 = vmatprep.subr.mxu0 0.0
      %263 = vmatpush1.msra.mxu0 0.0
      %264 = vmatprep.subr.mxu0 0.0
      %265 = vmatpush1.msra.mxu0 0.0
      %266 = vmatprep.subr.mxu0 0.0
      %267 = vmatpush1.msra.mxu0 0.0
      %268 = vmatprep.subr.mxu0 0.0
      %269 = vmatpush1.msra.mxu0 0.0
      %270 = vmatprep.subr.mxu0 0.0
      %271 = vmatpush1.msra.mxu0 0.0
      %272 = vmatprep.subr.mxu0 0.0
      %273 = vmatpush1.msra.mxu0 0.0
      %274 = vmatprep.subr.mxu0 0.0
      %275 = vmatpush1.msra.mxu0 0.0
      %276 = vmatprep.subr.mxu0 0.0
      %277 = vmatpush1.msra.mxu0 0.0
      %278 = vmatprep.subr.mxu0 0.0
      %279 = vmatpush1.msra.mxu0 0.0
      %280 = vmatprep.subr.mxu0 0.0
      %281 = vmatpush1.msra.mxu0 0.0
      %282 = vmatprep.subr.mxu0 0.0
      %283 = vmatpush1.msra.mxu0 0.0
      %284 = vmatprep.subr.mxu0 0.0
      %285 = vmatpush1.msra.mxu0 0.0
      %286 = vmatprep.subr.mxu0 0.0
      %287 = vmatpush1.msra.mxu0 0.0
      %288 = vmatprep.subr.mxu0 %v256
      %289 = vmatpush1.msra.mxu0 %v254
      %290 = vmatprep.subr.mxu0 0.0
      %291 = vmatpush2.msra.mxu0 0.0
      %292 = vmatprep.subr.mxu0 0.0
      %293 = vmatpush2.msra.mxu0 0.0
      %294 = vmatprep.subr.mxu0 0.0
      %295 = vmatpush2.msra.mxu0 0.0
      %296 = vmatprep.subr.mxu0 0.0
      %297 = vmatpush2.msra.mxu0 0.0
      %298 = vmatprep.subr.mxu0 0.0
      %299 = vmatpush2.msra.mxu0 0.0
      %300 = vmatprep.subr.mxu0 0.0
      %301 = vmatpush2.msra.mxu0 0.0
      %302 = vmatprep.subr.mxu0 0.0
      %303 = vmatpush2.msra.mxu0 0.0
      %304 = vmatprep.subr.mxu0 0.0
      %305 = vmatpush2.msra.mxu0 0.0
      %306 = vmatprep.subr.mxu0 0.0
      %307 = vmatpush2.msra.mxu0 0.0
      %308 = vmatprep.subr.mxu0 0.0
      %309 = vmatpush2.msra.mxu0 0.0
      %310 = vmatprep.subr.mxu0 0.0
      %311 = vmatpush2.msra.mxu0 0.0
      %312 = vmatprep.subr.mxu0 0.0
      %313 = vmatpush2.msra.mxu0 0.0
      %314 = vmatprep.subr.mxu0 0.0
      %315 = vmatpush2.msra.mxu0 0.0
      %316 = vmatprep.subr.mxu0 0.0
      %317 = vmatpush2.msra.mxu0 0.0
      %318 = vmatprep.subr.mxu0 0.0
      %319 = vmatpush2.msra.mxu0 0.0
      %320 = vmatprep.subr.mxu0 0.0
      %321 = vmatpush2.msra.mxu0 0.0
      %322 = vmatprep.mubr.f32.mxu0 0.0
      %323 = vmatmul.mubr.f32.gmra.mxu0 %v251
      %v324 = vpop.f32.mrf.mxu0
      %v325 = vadd.f32 0.0, %v324
      %v326 = vpop.f32.mrf.mxu0
      %v327 = vadd.f32 0.0, %v326
      %328 = vdwg.mxu0
      %v329 = vld [vmem:[%s3] sm:$0xff]
      %v330 = vld [vmem:[%s3 + $0x8] sm:$0xff]
      %v331 = vld [vmem:[%s3 + $0x10] sm:$0xff]
      %v332 = vld [vmem:[%s3 + $0x18] sm:$0xff]
      %v333 = vld [vmem:[%s3 + $0x20] sm:$0xff]
      %v334 = vld [vmem:[%s3 + $0x28] sm:$0xff]
      %v335 = vld [vmem:[%s3 + $0x30] sm:$0xff]
      %v336 = vld [vmem:[%s3 + $0x38] sm:$0xff]
      %v337 = vld [vmem:[%s3 + $0x40] sm:$0xff]
      %v338 = vld [vmem:[%s3 + $0x48] sm:$0xff]
      %v339 = vld [vmem:[%s3 + $0x50] sm:$0xff]
      %v340 = vld [vmem:[%s3 + $0x58] sm:$0xff]
      %v341 = vld [vmem:[%s3 + $0x60] sm:$0xff]
      %v342 = vld [vmem:[%s3 + $0x68] sm:$0xff]
      %v343 = vld [vmem:[%s3 + $0x70] sm:$0xff]
      %v344 = vld [vmem:[%s3 + $0x78] sm:$0xff]
      %v345 = vld [vmem:[%s3 + $0x80] sm:$0xff]
      %v346 = vld [vmem:[%s3 + $0x88] sm:$0xff]
      %v347 = vld [vmem:[%s3 + $0x90] sm:$0xff]
      %v348 = vld [vmem:[%s3 + $0x98] sm:$0xff]
      %v349 = vld [vmem:[%s3 + $0xa0] sm:$0xff]
      %v350 = vld [vmem:[%s3 + $0xa8] sm:$0xff]
      %v351 = vld [vmem:[%s3 + $0xb0] sm:$0xff]
      %v352 = vld [vmem:[%s3 + $0xb8] sm:$0xff]
      %v353 = vld [vmem:[%s3 + $0xc0] sm:$0xff]
      %v354 = vld [vmem:[%s3 + $0xc8] sm:$0xff]
      %v355 = vld [vmem:[%s3 + $0xd0] sm:$0xff]
      %v356 = vld [vmem:[%s3 + $0xd8] sm:$0xff]
      %v357 = vld [vmem:[%s3 + $0xe0] sm:$0xff]
      %v358 = vld [vmem:[%s3 + $0xe8] sm:$0xff]
      %v359 = vld [vmem:[%s3 + $0xf0] sm:$0xff]
      %v360 = vld [vmem:[%s3 + $0xf8] sm:$0xff]
      %v361 = vld [vmem:[%s3 + $0x100] sm:$0xff]
      %v362 = vld [vmem:[%s3 + $0x108] sm:$0xff]
      %v363 = vld [vmem:[%s3 + $0x110] sm:$0xff]
      %v364 = vld [vmem:[%s3 + $0x118] sm:$0xff]
      %v365 = vld [vmem:[%s3 + $0x120] sm:$0xff]
      %v366 = vld [vmem:[%s3 + $0x128] sm:$0xff]
      %v367 = vld [vmem:[%s3 + $0x130] sm:$0xff]
      %v368 = vld [vmem:[%s3 + $0x138] sm:$0xff]
      %v369 = vld [vmem:[%s3 + $0x140] sm:$0xff]
      %v370 = vld [vmem:[%s3 + $0x148] sm:$0xff]
      %v371 = vld [vmem:[%s3 + $0x150] sm:$0xff]
      %v372 = vld [vmem:[%s3 + $0x158] sm:$0xff]
      %v373 = vld [vmem:[%s3 + $0x160] sm:$0xff]
      %v374 = vld [vmem:[%s3 + $0x168] sm:$0xff]
      %v375 = vld [vmem:[%s3 + $0x170] sm:$0xff]
      %v376 = vld [vmem:[%s3 + $0x178] sm:$0xff]
      %v377 = vld [vmem:[%s3 + $0x180] sm:$0xff]
      %v378 = vld [vmem:[%s3 + $0x188] sm:$0xff]
      %v379 = vld [vmem:[%s3 + $0x190] sm:$0xff]
      %v380 = vld [vmem:[%s3 + $0x198] sm:$0xff]
      %v381 = vld [vmem:[%s3 + $0x1a0] sm:$0xff]
      %v382 = vld [vmem:[%s3 + $0x1a8] sm:$0xff]
      %v383 = vld [vmem:[%s3 + $0x1b0] sm:$0xff]
      %v384 = vld [vmem:[%s3 + $0x1b8] sm:$0xff]
      %v385 = vld [vmem:[%s3 + $0x1c0] sm:$0xff]
      %v386 = vld [vmem:[%s3 + $0x1c8] sm:$0xff]
      %v387 = vld [vmem:[%s3 + $0x1d0] sm:$0xff]
      %v388 = vld [vmem:[%s3 + $0x1d8] sm:$0xff]
      %v389 = vld [vmem:[%s3 + $0x1e0] sm:$0xff]
      %v390 = vld [vmem:[%s3 + $0x1e8] sm:$0xff]
      %v391 = vld [vmem:[%s3 + $0x1f0] sm:$0xff]
      %v392 = vld [vmem:[%s3 + $0x1f8] sm:$0xff]
      %v393 = vld [vmem:[%s3 + $0x200] sm:$0xff]
      %v394 = vld [vmem:[%s3 + $0x208] sm:$0xff]
      %v395 = vld [vmem:[%s3 + $0x210] sm:$0xff]
      %v396 = vld [vmem:[%s3 + $0x218] sm:$0xff]
      %v397 = vld [vmem:[%s3 + $0x220] sm:$0xff]
      %v398 = vld [vmem:[%s3 + $0x228] sm:$0xff]
      %v399 = vld [vmem:[%s3 + $0x230] sm:$0xff]
      %v400 = vld [vmem:[%s3 + $0x238] sm:$0xff]
      %v401 = vld [vmem:[%s3 + $0x240] sm:$0xff]
      %v402 = vld [vmem:[%s3 + $0x248] sm:$0xff]
      %v403 = vld [vmem:[%s3 + $0x250] sm:$0xff]
      %v404 = vld [vmem:[%s3 + $0x258] sm:$0xff]
      %v405 = vld [vmem:[%s3 + $0x260] sm:$0xff]
      %v406 = vld [vmem:[%s3 + $0x268] sm:$0xff]
      %v407 = vld [vmem:[%s3 + $0x270] sm:$0xff]
      %v408 = vld [vmem:[%s3 + $0x278] sm:$0xff]
      %v409 = vld [vmem:[%s3 + $0x280] sm:$0xff]
      %v410 = vld [vmem:[%s3 + $0x288] sm:$0xff]
      %v411 = vld [vmem:[%s3 + $0x290] sm:$0xff]
      %v412 = vld [vmem:[%s3 + $0x298] sm:$0xff]
      %v413 = vld [vmem:[%s3 + $0x2a0] sm:$0xff]
      %v414 = vld [vmem:[%s3 + $0x2a8] sm:$0xff]
      %v415 = vld [vmem:[%s3 + $0x2b0] sm:$0xff]
      %v416 = vld [vmem:[%s3 + $0x2b8] sm:$0xff]
      %v417 = vld [vmem:[%s3 + $0x2c0] sm:$0xff]
      %v418 = vld [vmem:[%s3 + $0x2c8] sm:$0xff]
      %v419 = vld [vmem:[%s3 + $0x2d0] sm:$0xff]
      %v420 = vld [vmem:[%s3 + $0x2d8] sm:$0xff]
      %v421 = vld [vmem:[%s3 + $0x2e0] sm:$0xff]
      %v422 = vld [vmem:[%s3 + $0x2e8] sm:$0xff]
      %v423 = vld [vmem:[%s3 + $0x2f0] sm:$0xff]
      %v424 = vld [vmem:[%s3 + $0x2f8] sm:$0xff]
      %v425 = vld [vmem:[%s3 + $0x300] sm:$0xff]
      %v426 = vld [vmem:[%s3 + $0x308] sm:$0xff]
      %v427 = vld [vmem:[%s3 + $0x310] sm:$0xff]
      %v428 = vld [vmem:[%s3 + $0x318] sm:$0xff]
      %v429 = vld [vmem:[%s3 + $0x320] sm:$0xff]
      %v430 = vld [vmem:[%s3 + $0x328] sm:$0xff]
      %v431 = vld [vmem:[%s3 + $0x330] sm:$0xff]
      %v432 = vld [vmem:[%s3 + $0x338] sm:$0xff]
      %v433 = vld [vmem:[%s3 + $0x340] sm:$0xff]
      %v434 = vld [vmem:[%s3 + $0x348] sm:$0xff]
      %v435 = vld [vmem:[%s3 + $0x350] sm:$0xff]
      %v436 = vld [vmem:[%s3 + $0x358] sm:$0xff]
      %v437 = vld [vmem:[%s3 + $0x360] sm:$0xff]
      %v438 = vld [vmem:[%s3 + $0x368] sm:$0xff]
      %v439 = vld [vmem:[%s3 + $0x370] sm:$0xff]
      %v440 = vld [vmem:[%s3 + $0x378] sm:$0xff]
      %v441 = vld [vmem:[%s3 + $0x380] sm:$0xff]
      %v442 = vld [vmem:[%s3 + $0x388] sm:$0xff]
      %v443 = vld [vmem:[%s3 + $0x390] sm:$0xff]
      %v444 = vld [vmem:[%s3 + $0x398] sm:$0xff]
      %v445 = vld [vmem:[%s3 + $0x3a0] sm:$0xff]
      %v446 = vld [vmem:[%s3 + $0x3a8] sm:$0xff]
      %v447 = vld [vmem:[%s3 + $0x3b0] sm:$0xff]
      %v448 = vld [vmem:[%s3 + $0x3b8] sm:$0xff]
      %v449 = vld [vmem:[%s3 + $0x3c0] sm:$0xff]
      %v450 = vld [vmem:[%s3 + $0x3c8] sm:$0xff]
      %v451 = vld [vmem:[%s3 + $0x3d0] sm:$0xff]
      %v452 = vld [vmem:[%s3 + $0x3d8] sm:$0xff]
      %v453 = vld [vmem:[%s3 + $0x3e0] sm:$0xff]
      %v454 = vld [vmem:[%s3 + $0x3e8] sm:$0xff]
      %v455 = vld [vmem:[%s3 + $0x3f0] sm:$0xff]
      %v456 = vld [vmem:[%s3 + $0x3f8] sm:$0xff]
      %v457 = vld [vmem:[%s3 + $0x400] sm:$0xff]
      %v458 = vld [vmem:[%s3 + $0x408] sm:$0xff]
      %v459 = vld [vmem:[%s3 + $0x410] sm:$0xff]
      %v460 = vld [vmem:[%s3 + $0x418] sm:$0xff]
      %v461 = vld [vmem:[%s3 + $0x420] sm:$0xff]
      %v462 = vld [vmem:[%s3 + $0x428] sm:$0xff]
      %v463 = vld [vmem:[%s3 + $0x430] sm:$0xff]
      %v464 = vld [vmem:[%s3 + $0x438] sm:$0xff]
      %v465 = vld [vmem:[%s3 + $0x440] sm:$0xff]
      %v466 = vld [vmem:[%s3 + $0x448] sm:$0xff]
      %v467 = vld [vmem:[%s3 + $0x450] sm:$0xff]
      %v468 = vld [vmem:[%s3 + $0x458] sm:$0xff]
      %v469 = vld [vmem:[%s3 + $0x460] sm:$0xff]
      %v470 = vld [vmem:[%s3 + $0x468] sm:$0xff]
      %v471 = vld [vmem:[%s3 + $0x470] sm:$0xff]
      %v472 = vld [vmem:[%s3 + $0x478] sm:$0xff]
      %v473 = vld [vmem:[%s3 + $0x480] sm:$0xff]
      %v474 = vld [vmem:[%s3 + $0x488] sm:$0xff]
      %v475 = vld [vmem:[%s3 + $0x490] sm:$0xff]
      %v476 = vld [vmem:[%s3 + $0x498] sm:$0xff]
      %v477 = vld [vmem:[%s3 + $0x4a0] sm:$0xff]
      %v478 = vld [vmem:[%s3 + $0x4a8] sm:$0xff]
      %v479 = vld [vmem:[%s3 + $0x4b0] sm:$0xff]
      %v480 = vld [vmem:[%s3 + $0x4b8] sm:$0xff]
      %v481 = vld [vmem:[%s3 + $0x4c0] sm:$0xff]
      %v482 = vld [vmem:[%s3 + $0x4c8] sm:$0xff]
      %v483 = vld [vmem:[%s3 + $0x4d0] sm:$0xff]
      %v484 = vld [vmem:[%s3 + $0x4d8] sm:$0xff]
      %v485 = vld [vmem:[%s3 + $0x4e0] sm:$0xff]
      %v486 = vld [vmem:[%s3 + $0x4e8] sm:$0xff]
      %v487 = vld [vmem:[%s3 + $0x4f0] sm:$0xff]
      %v488 = vld [vmem:[%s3 + $0x4f8] sm:$0xff]
      %v489 = vld [vmem:[%s3 + $0x500] sm:$0xff]
      %v490 = vld [vmem:[%s3 + $0x508] sm:$0xff]
      %v491 = vld [vmem:[%s3 + $0x510] sm:$0xff]
      %v492 = vld [vmem:[%s3 + $0x518] sm:$0xff]
      %v493 = vld [vmem:[%s3 + $0x520] sm:$0xff]
      %v494 = vld [vmem:[%s3 + $0x528] sm:$0xff]
      %v495 = vld [vmem:[%s3 + $0x530] sm:$0xff]
      %v496 = vld [vmem:[%s3 + $0x538] sm:$0xff]
      %v497 = vld [vmem:[%s3 + $0x540] sm:$0xff]
      %v498 = vld [vmem:[%s3 + $0x548] sm:$0xff]
      %v499 = vld [vmem:[%s3 + $0x550] sm:$0xff]
      %v500 = vld [vmem:[%s3 + $0x558] sm:$0xff]
      %v501 = vld [vmem:[%s3 + $0x560] sm:$0xff]
      %v502 = vld [vmem:[%s3 + $0x568] sm:$0xff]
      %v503 = vld [vmem:[%s3 + $0x570] sm:$0xff]
      %v504 = vld [vmem:[%s3 + $0x578] sm:$0xff]
      %v505 = vld [vmem:[%s3 + $0x580] sm:$0xff]
      %v506 = vld [vmem:[%s3 + $0x588] sm:$0xff]
      %v507 = vld [vmem:[%s3 + $0x590] sm:$0xff]
      %v508 = vld [vmem:[%s3 + $0x598] sm:$0xff]
      %v509 = vld [vmem:[%s3 + $0x5a0] sm:$0xff]
      %v510 = vld [vmem:[%s3 + $0x5a8] sm:$0xff]
      %v511 = vld [vmem:[%s3 + $0x5b0] sm:$0xff]
      %v512 = vld [vmem:[%s3 + $0x5b8] sm:$0xff]
      %v513 = vld [vmem:[%s3 + $0x5c0] sm:$0xff]
      %v514 = vld [vmem:[%s3 + $0x5c8] sm:$0xff]
      %v515 = vld [vmem:[%s3 + $0x5d0] sm:$0xff]
      %v516 = vld [vmem:[%s3 + $0x5d8] sm:$0xff]
      %v517 = vld [vmem:[%s3 + $0x5e0] sm:$0xff]
      %v518 = vld [vmem:[%s3 + $0x5e8] sm:$0xff]
      %v519 = vld [vmem:[%s3 + $0x5f0] sm:$0xff]
      %v520 = vld [vmem:[%s3 + $0x5f8] sm:$0xff]
      %v521 = vld [vmem:[%s3 + $0x600] sm:$0xff]
      %v522 = vld [vmem:[%s3 + $0x608] sm:$0xff]
      %v523 = vld [vmem:[%s3 + $0x610] sm:$0xff]
      %v524 = vld [vmem:[%s3 + $0x618] sm:$0xff]
      %v525 = vld [vmem:[%s3 + $0x620] sm:$0xff]
      %v526 = vld [vmem:[%s3 + $0x628] sm:$0xff]
      %v527 = vld [vmem:[%s3 + $0x630] sm:$0xff]
      %v528 = vld [vmem:[%s3 + $0x638] sm:$0xff]
      %v529 = vld [vmem:[%s3 + $0x640] sm:$0xff]
      %v530 = vld [vmem:[%s3 + $0x648] sm:$0xff]
      %v531 = vld [vmem:[%s3 + $0x650] sm:$0xff]
      %v532 = vld [vmem:[%s3 + $0x658] sm:$0xff]
      %v533 = vld [vmem:[%s3 + $0x660] sm:$0xff]
      %v534 = vld [vmem:[%s3 + $0x668] sm:$0xff]
      %v535 = vld [vmem:[%s3 + $0x670] sm:$0xff]
      %v536 = vld [vmem:[%s3 + $0x678] sm:$0xff]
      %v537 = vld [vmem:[%s3 + $0x680] sm:$0xff]
      %v538 = vld [vmem:[%s3 + $0x688] sm:$0xff]
      %v539 = vld [vmem:[%s3 + $0x690] sm:$0xff]
      %v540 = vld [vmem:[%s3 + $0x698] sm:$0xff]
      %v541 = vld [vmem:[%s3 + $0x6a0] sm:$0xff]
      %v542 = vld [vmem:[%s3 + $0x6a8] sm:$0xff]
      %v543 = vld [vmem:[%s3 + $0x6b0] sm:$0xff]
      %v544 = vld [vmem:[%s3 + $0x6b8] sm:$0xff]
      %v545 = vld [vmem:[%s3 + $0x6c0] sm:$0xff]
      %v546 = vld [vmem:[%s3 + $0x6c8] sm:$0xff]
      %v547 = vld [vmem:[%s3 + $0x6d0] sm:$0xff]
      %v548 = vld [vmem:[%s3 + $0x6d8] sm:$0xff]
      %v549 = vld [vmem:[%s3 + $0x6e0] sm:$0xff]
      %v550 = vld [vmem:[%s3 + $0x6e8] sm:$0xff]
      %v551 = vld [vmem:[%s3 + $0x6f0] sm:$0xff]
      %v552 = vld [vmem:[%s3 + $0x6f8] sm:$0xff]
      %v553 = vld [vmem:[%s3 + $0x700] sm:$0xff]
      %v554 = vld [vmem:[%s3 + $0x708] sm:$0xff]
      %v555 = vld [vmem:[%s3 + $0x710] sm:$0xff]
      %v556 = vld [vmem:[%s3 + $0x718] sm:$0xff]
      %v557 = vld [vmem:[%s3 + $0x720] sm:$0xff]
      %v558 = vld [vmem:[%s3 + $0x728] sm:$0xff]
      %v559 = vld [vmem:[%s3 + $0x730] sm:$0xff]
      %v560 = vld [vmem:[%s3 + $0x738] sm:$0xff]
      %v561 = vld [vmem:[%s3 + $0x740] sm:$0xff]
      %v562 = vld [vmem:[%s3 + $0x748] sm:$0xff]
      %v563 = vld [vmem:[%s3 + $0x750] sm:$0xff]
      %v564 = vld [vmem:[%s3 + $0x758] sm:$0xff]
      %v565 = vld [vmem:[%s3 + $0x760] sm:$0xff]
      %v566 = vld [vmem:[%s3 + $0x768] sm:$0xff]
      %v567 = vld [vmem:[%s3 + $0x770] sm:$0xff]
      %v568 = vld [vmem:[%s3 + $0x778] sm:$0xff]
      %v569 = vld [vmem:[%s3 + $0x780] sm:$0xff]
      %v570 = vld [vmem:[%s3 + $0x788] sm:$0xff]
      %v571 = vld [vmem:[%s3 + $0x790] sm:$0xff]
      %v572 = vld [vmem:[%s3 + $0x798] sm:$0xff]
      %v573 = vld [vmem:[%s3 + $0x7a0] sm:$0xff]
      %v574 = vld [vmem:[%s3 + $0x7a8] sm:$0xff]
      %v575 = vld [vmem:[%s3 + $0x7b0] sm:$0xff]
      %v576 = vld [vmem:[%s3 + $0x7b8] sm:$0xff]
      %v577 = vld [vmem:[%s3 + $0x7c0] sm:$0xff]
      %v578 = vld [vmem:[%s3 + $0x7c8] sm:$0xff]
      %v579 = vld [vmem:[%s3 + $0x7d0] sm:$0xff]
      %v580 = vld [vmem:[%s3 + $0x7d8] sm:$0xff]
      %v581 = vld [vmem:[%s3 + $0x7e0] sm:$0xff]
      %v582 = vld [vmem:[%s3 + $0x7e8] sm:$0xff]
      %v583 = vld [vmem:[%s3 + $0x7f0] sm:$0xff]
      %v584 = vld [vmem:[%s3 + $0x7f8] sm:$0xff]
      %v585 = vld [vmem:[%s2] sm:$0xff]
      %587 = vset.pattern.permute.xlu0 0
      %588 = vperm.xlu0 %587, %v585
      %v589 = vpop.permute.xlu0 %588
      %591 = vmatprep.subr.mxu0 %v450
      %592 = vmatpush1.msra.mxu0 %v449
      %593 = vmatprep.subr.mxu0 %v442
      %594 = vmatpush1.msra.mxu0 %v441
      %595 = vmatprep.subr.mxu0 %v434
      %596 = vmatpush1.msra.mxu0 %v433
      %597 = vmatprep.subr.mxu0 %v426
      %598 = vmatpush1.msra.mxu0 %v425
      %599 = vmatprep.subr.mxu0 %v418
      %600 = vmatpush1.msra.mxu0 %v417
      %601 = vmatprep.subr.mxu0 %v410
      %602 = vmatpush1.msra.mxu0 %v409
      %603 = vmatprep.subr.mxu0 %v402
      %604 = vmatpush1.msra.mxu0 %v401
      %605 = vmatprep.subr.mxu0 %v394
      %606 = vmatpush1.msra.mxu0 %v393
      %607 = vmatprep.subr.mxu0 %v386
      %608 = vmatpush1.msra.mxu0 %v385
      %609 = vmatprep.subr.mxu0 %v378
      %610 = vmatpush1.msra.mxu0 %v377
      %611 = vmatprep.subr.mxu0 %v370
      %612 = vmatpush1.msra.mxu0 %v369
      %613 = vmatprep.subr.mxu0 %v362
      %614 = vmatpush1.msra.mxu0 %v361
      %615 = vmatprep.subr.mxu0 %v354
      %616 = vmatpush1.msra.mxu0 %v353
      %617 = vmatprep.subr.mxu0 %v346
      %618 = vmatpush1.msra.mxu0 %v345
      %619 = vmatprep.subr.mxu0 %v338
      %620 = vmatpush1.msra.mxu0 %v337
      %621 = vmatprep.subr.mxu0 %v330
      %622 = vmatpush1.msra.mxu0 %v329
      %623 = vmatprep.subr.mxu0 %v578
      %624 = vmatpush2.msra.mxu0 %v577
      %625 = vmatprep.subr.mxu0 %v570
      %626 = vmatpush2.msra.mxu0 %v569
      %627 = vmatprep.subr.mxu0 %v562
      %628 = vmatpush2.msra.mxu0 %v561
      %629 = vmatprep.subr.mxu0 %v554
      %630 = vmatpush2.msra.mxu0 %v553
      %631 = vmatprep.subr.mxu0 %v546
      %632 = vmatpush2.msra.mxu0 %v545
      %633 = vmatprep.subr.mxu0 %v538
      %634 = vmatpush2.msra.mxu0 %v537
      %635 = vmatprep.subr.mxu0 %v530
      %636 = vmatpush2.msra.mxu0 %v529
      %637 = vmatprep.subr.mxu0 %v522
      %638 = vmatpush2.msra.mxu0 %v521
      %639 = vmatprep.subr.mxu0 %v514
      %640 = vmatpush2.msra.mxu0 %v513
      %641 = vmatprep.subr.mxu0 %v506
      %642 = vmatpush2.msra.mxu0 %v505
      %643 = vmatprep.subr.mxu0 %v498
      %644 = vmatpush2.msra.mxu0 %v497
      %645 = vmatprep.subr.mxu0 %v490
      %646 = vmatpush2.msra.mxu0 %v489
      %647 = vmatprep.subr.mxu0 %v482
      %648 = vmatpush2.msra.mxu0 %v481
      %649 = vmatprep.subr.mxu0 %v474
      %650 = vmatpush2.msra.mxu0 %v473
      %651 = vmatprep.subr.mxu0 %v466
      %652 = vmatpush2.msra.mxu0 %v465
      %653 = vmatprep.subr.mxu0 %v458
      %654 = vmatpush2.msra.mxu0 %v457
      %655 = vmatprep.mubr.f32.mxu0 %v327
      %656 = vmatmul.mubr.f32.gmra.mxu0 %v325
      %v657 = vpop.f32.mrf.mxu0
      %v658 = vadd.f32 %v589, %v657
      %v659 = vpop.f32.mrf.mxu0
      %v660 = vadd.f32 %v589, %v659
      %661 = vdwg.mxu0
      %662 = vmatprep.subr.mxu0 %v452
      %663 = vmatpush1.msra.mxu0 %v451
      %664 = vmatprep.subr.mxu0 %v444
      %665 = vmatpush1.msra.mxu0 %v443
      %666 = vmatprep.subr.mxu0 %v436
      %667 = vmatpush1.msra.mxu0 %v435
      %668 = vmatprep.subr.mxu0 %v428
      %669 = vmatpush1.msra.mxu0 %v427
      %670 = vmatprep.subr.mxu0 %v420
      %671 = vmatpush1.msra.mxu0 %v419
      %672 = vmatprep.subr.mxu0 %v412
      %673 = vmatpush1.msra.mxu0 %v411
      %674 = vmatprep.subr.mxu0 %v404
      %675 = vmatpush1.msra.mxu0 %v403
      %676 = vmatprep.subr.mxu0 %v396
      %677 = vmatpush1.msra.mxu0 %v395
      %678 = vmatprep.subr.mxu0 %v388
      %679 = vmatpush1.msra.mxu0 %v387
      %680 = vmatprep.subr.mxu0 %v380
      %681 = vmatpush1.msra.mxu0 %v379
      %682 = vmatprep.subr.mxu0 %v372
      %683 = vmatpush1.msra.mxu0 %v371
      %684 = vmatprep.subr.mxu0 %v364
      %685 = vmatpush1.msra.mxu0 %v363
      %686 = vmatprep.subr.mxu0 %v356
      %687 = vmatpush1.msra.mxu0 %v355
      %688 = vmatprep.subr.mxu0 %v348
      %689 = vmatpush1.msra.mxu0 %v347
      %690 = vmatprep.subr.mxu0 %v340
      %691 = vmatpush1.msra.mxu0 %v339
      %692 = vmatprep.subr.mxu0 %v332
      %693 = vmatpush1.msra.mxu0 %v331
      %694 = vmatprep.subr.mxu0 %v580
      %695 = vmatpush2.msra.mxu0 %v579
      %696 = vmatprep.subr.mxu0 %v572
      %697 = vmatpush2.msra.mxu0 %v571
      %698 = vmatprep.subr.mxu0 %v564
      %699 = vmatpush2.msra.mxu0 %v563
      %700 = vmatprep.subr.mxu0 %v556
      %701 = vmatpush2.msra.mxu0 %v555
      %702 = vmatprep.subr.mxu0 %v548
      %703 = vmatpush2.msra.mxu0 %v547
      %704 = vmatprep.subr.mxu0 %v540
      %705 = vmatpush2.msra.mxu0 %v539
      %706 = vmatprep.subr.mxu0 %v532
      %707 = vmatpush2.msra.mxu0 %v531
      %708 = vmatprep.subr.mxu0 %v524
      %709 = vmatpush2.msra.mxu0 %v523
      %710 = vmatprep.subr.mxu0 %v516
      %711 = vmatpush2.msra.mxu0 %v515
      %712 = vmatprep.subr.mxu0 %v508
      %713 = vmatpush2.msra.mxu0 %v507
      %714 = vmatprep.subr.mxu0 %v500
      %715 = vmatpush2.msra.mxu0 %v499
      %716 = vmatprep.subr.mxu0 %v492
      %717 = vmatpush2.msra.mxu0 %v491
      %718 = vmatprep.subr.mxu0 %v484
      %719 = vmatpush2.msra.mxu0 %v483
      %720 = vmatprep.subr.mxu0 %v476
      %721 = vmatpush2.msra.mxu0 %v475
      %722 = vmatprep.subr.mxu0 %v468
      %723 = vmatpush2.msra.mxu0 %v467
      %724 = vmatprep.subr.mxu0 %v460
      %725 = vmatpush2.msra.mxu0 %v459
      %726 = vmatprep.mubr.f32.mxu0 %v327
      %727 = vmatmul.mubr.f32.gmra.mxu0 %v325
      %v728 = vpop.f32.mrf.mxu0
      %v729 = vadd.f32 %v589, %v728
      %v730 = vpop.f32.mrf.mxu0
      %v731 = vadd.f32 %v589, %v730
      %732 = vdwg.mxu0
      %733 = vmatprep.subr.mxu0 %v454
      %734 = vmatpush1.msra.mxu0 %v453
      %735 = vmatprep.subr.mxu0 %v446
      %736 = vmatpush1.msra.mxu0 %v445
      %737 = vmatprep.subr.mxu0 %v438
      %738 = vmatpush1.msra.mxu0 %v437
      %739 = vmatprep.subr.mxu0 %v430
      %740 = vmatpush1.msra.mxu0 %v429
      %741 = vmatprep.subr.mxu0 %v422
      %742 = vmatpush1.msra.mxu0 %v421
      %743 = vmatprep.subr.mxu0 %v414
      %744 = vmatpush1.msra.mxu0 %v413
      %745 = vmatprep.subr.mxu0 %v406
      %746 = vmatpush1.msra.mxu0 %v405
      %747 = vmatprep.subr.mxu0 %v398
      %748 = vmatpush1.msra.mxu0 %v397
      %749 = vmatprep.subr.mxu0 %v390
      %750 = vmatpush1.msra.mxu0 %v389
      %751 = vmatprep.subr.mxu0 %v382
      %752 = vmatpush1.msra.mxu0 %v381
      %753 = vmatprep.subr.mxu0 %v374
      %754 = vmatpush1.msra.mxu0 %v373
      %755 = vmatprep.subr.mxu0 %v366
      %756 = vmatpush1.msra.mxu0 %v365
      %757 = vmatprep.subr.mxu0 %v358
      %758 = vmatpush1.msra.mxu0 %v357
      %759 = vmatprep.subr.mxu0 %v350
      %760 = vmatpush1.msra.mxu0 %v349
      %761 = vmatprep.subr.mxu0 %v342
      %762 = vmatpush1.msra.mxu0 %v341
      %763 = vmatprep.subr.mxu0 %v334
      %764 = vmatpush1.msra.mxu0 %v333
      %765 = vmatprep.subr.mxu0 %v582
      %766 = vmatpush2.msra.mxu0 %v581
      %767 = vmatprep.subr.mxu0 %v574
      %768 = vmatpush2.msra.mxu0 %v573
      %769 = vmatprep.subr.mxu0 %v566
      %770 = vmatpush2.msra.mxu0 %v565
      %771 = vmatprep.subr.mxu0 %v558
      %772 = vmatpush2.msra.mxu0 %v557
      %773 = vmatprep.subr.mxu0 %v550
      %774 = vmatpush2.msra.mxu0 %v549
      %775 = vmatprep.subr.mxu0 %v542
      %776 = vmatpush2.msra.mxu0 %v541
      %777 = vmatprep.subr.mxu0 %v534
      %778 = vmatpush2.msra.mxu0 %v533
      %779 = vmatprep.subr.mxu0 %v526
      %780 = vmatpush2.msra.mxu0 %v525
      %781 = vmatprep.subr.mxu0 %v518
      %782 = vmatpush2.msra.mxu0 %v517
      %783 = vmatprep.subr.mxu0 %v510
      %784 = vmatpush2.msra.mxu0 %v509
      %785 = vmatprep.subr.mxu0 %v502
      %786 = vmatpush2.msra.mxu0 %v501
      %787 = vmatprep.subr.mxu0 %v494
      %788 = vmatpush2.msra.mxu0 %v493
      %789 = vmatprep.subr.mxu0 %v486
      %790 = vmatpush2.msra.mxu0 %v485
      %791 = vmatprep.subr.mxu0 %v478
      %792 = vmatpush2.msra.mxu0 %v477
      %793 = vmatprep.subr.mxu0 %v470
      %794 = vmatpush2.msra.mxu0 %v469
      %795 = vmatprep.subr.mxu0 %v462
      %796 = vmatpush2.msra.mxu0 %v461
      %797 = vmatprep.mubr.f32.mxu0 %v327
      %798 = vmatmul.mubr.f32.gmra.mxu0 %v325
      %v799 = vpop.f32.mrf.mxu0
      %v800 = vadd.f32 %v589, %v799
      %v801 = vpop.f32.mrf.mxu0
      %v802 = vadd.f32 %v589, %v801
      %803 = vdwg.mxu0
      %804 = vmatprep.subr.mxu0 %v456
      %805 = vmatpush1.msra.mxu0 %v455
      %806 = vmatprep.subr.mxu0 %v448
      %807 = vmatpush1.msra.mxu0 %v447
      %808 = vmatprep.subr.mxu0 %v440
      %809 = vmatpush1.msra.mxu0 %v439
      %810 = vmatprep.subr.mxu0 %v432
      %811 = vmatpush1.msra.mxu0 %v431
      %812 = vmatprep.subr.mxu0 %v424
      %813 = vmatpush1.msra.mxu0 %v423
      %814 = vmatprep.subr.mxu0 %v416
      %815 = vmatpush1.msra.mxu0 %v415
      %816 = vmatprep.subr.mxu0 %v408
      %817 = vmatpush1.msra.mxu0 %v407
      %818 = vmatprep.subr.mxu0 %v400
      %819 = vmatpush1.msra.mxu0 %v399
      %820 = vmatprep.subr.mxu0 %v392
      %821 = vmatpush1.msra.mxu0 %v391
      %822 = vmatprep.subr.mxu0 %v384
      %823 = vmatpush1.msra.mxu0 %v383
      %824 = vmatprep.subr.mxu0 %v376
      %825 = vmatpush1.msra.mxu0 %v375
      %826 = vmatprep.subr.mxu0 %v368
      %827 = vmatpush1.msra.mxu0 %v367
      %828 = vmatprep.subr.mxu0 %v360
      %829 = vmatpush1.msra.mxu0 %v359
      %830 = vmatprep.subr.mxu0 %v352
      %831 = vmatpush1.msra.mxu0 %v351
      %832 = vmatprep.subr.mxu0 %v344
      %833 = vmatpush1.msra.mxu0 %v343
      %834 = vmatprep.subr.mxu0 %v336
      %835 = vmatpush1.msra.mxu0 %v335
      %836 = vmatprep.subr.mxu0 %v584
      %837 = vmatpush2.msra.mxu0 %v583
      %838 = vmatprep.subr.mxu0 %v576
      %839 = vmatpush2.msra.mxu0 %v575
      %840 = vmatprep.subr.mxu0 %v568
      %841 = vmatpush2.msra.mxu0 %v567
      %842 = vmatprep.subr.mxu0 %v560
      %843 = vmatpush2.msra.mxu0 %v559
      %844 = vmatprep.subr.mxu0 %v552
      %845 = vmatpush2.msra.mxu0 %v551
      %846 = vmatprep.subr.mxu0 %v544
      %847 = vmatpush2.msra.mxu0 %v543
      %848 = vmatprep.subr.mxu0 %v536
      %849 = vmatpush2.msra.mxu0 %v535
      %850 = vmatprep.subr.mxu0 %v528
      %851 = vmatpush2.msra.mxu0 %v527
      %852 = vmatprep.subr.mxu0 %v520
      %853 = vmatpush2.msra.mxu0 %v519
      %854 = vmatprep.subr.mxu0 %v512
      %855 = vmatpush2.msra.mxu0 %v511
      %856 = vmatprep.subr.mxu0 %v504
      %857 = vmatpush2.msra.mxu0 %v503
      %858 = vmatprep.subr.mxu0 %v496
      %859 = vmatpush2.msra.mxu0 %v495
      %860 = vmatprep.subr.mxu0 %v488
      %861 = vmatpush2.msra.mxu0 %v487
      %862 = vmatprep.subr.mxu0 %v480
      %863 = vmatpush2.msra.mxu0 %v479
      %864 = vmatprep.subr.mxu0 %v472
      %865 = vmatpush2.msra.mxu0 %v471
      %866 = vmatprep.subr.mxu0 %v464
      %867 = vmatpush2.msra.mxu0 %v463
      %868 = vmatprep.mubr.f32.mxu0 %v327
      %869 = vmatmul.mubr.f32.gmra.mxu0 %v325
      %v870 = vpop.f32.mrf.mxu0
      %v871 = vadd.f32 %v589, %v870
      %v872 = vpop.f32.mrf.mxu0
      %v873 = vadd.f32 %v589, %v872
      %874 = vdwg.mxu0
      %875 = vst [vmem:[%s244] sm:$0xff] %v658
      %876 = vst [vmem:[%s244 + $0x8] sm:$0xff] %v660
      %877 = vst [vmem:[%s244 + $0x10] sm:$0xff] %v729
      %878 = vst [vmem:[%s244 + $0x18] sm:$0xff] %v731
      %879 = vst [vmem:[%s244 + $0x20] sm:$0xff] %v800
      %880 = vst [vmem:[%s244 + $0x28] sm:$0xff] %v802
      %881 = vst [vmem:[%s244 + $0x30] sm:$0xff] %v871
      %vm882 = vcmask 531456
      %883 = vst.msk [vmem:[%s244 + $0x38] sm:$0xff] %vm882, %v873
      %v884 = vld [vmem:[%s239] sm:$0xff]
      %v885 = vld [vmem:[%s239 + $0x8] sm:$0xff]
      %v886 = vld [vmem:[%s239 + $0x10] sm:$0xff]
      %v887 = vld [vmem:[%s239 + $0x18] sm:$0xff]
      %v892 = vcombine.high %v884, %v884
      %v893 = vcombine.high %v885, %v885
      %v894 = vcombine.high %v886, %v886
      %v895 = vcombine.high %v887, %v887
      %900 = vst [vmem:[%s244 + $0x40] sm:$0xf] %v884
      %901 = vst [vmem:[%s244 + $0x48] sm:$0xf] %v892
      %902 = vst [vmem:[%s244 + $0x50] sm:$0xf] %v885
      %903 = vst [vmem:[%s244 + $0x58] sm:$0xf] %v893
      %904 = vst [vmem:[%s244 + $0x60] sm:$0xf] %v886
      %905 = vst [vmem:[%s244 + $0x68] sm:$0xf] %v894
      %906 = vst [vmem:[%s244 + $0x70] sm:$0xf] %v887
      %vm907 = vcmask 527360
      %908 = vst.msk [vmem:[%s244 + $0x78] sm:$0xf] %vm907, %v895
      %p909 = scmp.lt.s32.totalorder %s16, 1
      %s910 = scalar_select %p909, %s16, 1
      %s911 = smul.addr %s910, 16
      %s912 = smul.addr %s911, 8
      %s913 = scalar_lea.vmem %s5, %s912
      // Predicated region
      $region41: #{tpu_custom_call.1} parent=39 // pred_check
        %p914 = pneg %p149
      $region42: #{tpu_custom_call.1} parent=39 // pred_check_branch
        %916 = sbr.rel (%p914) target = $region44
      $region43: #{tpu_custom_call.1} parent=39 // pred_region
        _
      $region44: #{tpu_custom_call.1} parent=39 // pred_fallthru
        _
    $region40: #{tpu_custom_call.1} parent=5 // pred_fallthru
      _
    %p917 = scmp.le.s32.totalorder 2, %s11
    // Predicated region
    $region45: #{tpu_custom_call.1} parent=5 // pred_check
      %p918 = pneg %p917
    $region46: #{tpu_custom_call.1} parent=5 // pred_check_branch
      %920 = sbr.rel (%p918) target = $region48
    $region47: #{tpu_custom_call.1} parent=5 // pred_region
      %s921 = ssub.s32 %s11, 2
      // Predicated region
      $region49: #{tpu_custom_call.1} parent=47 // pred_check
        %p922 = pneg %p155
      $region50: #{tpu_custom_call.1} parent=47 // pred_check_branch
        %924 = sbr.rel (%p922) target = $region52
      $region51: #{tpu_custom_call.1} parent=47 // pred_region
        %p925 = scmp.lt.s32.totalorder %s17, 1
        %s926 = scalar_select %p925, %s17, 1
        %s927 = smul.addr %s926, 16
        %s928 = smul.addr %s927, 8
        %s929 = scalar_lea.vmem %s5, %s928
      $region52: #{tpu_custom_call.1} parent=47 // pred_fallthru
        _
    $region48: #{tpu_custom_call.1} parent=5 // pred_fallthru
      _
  $region6: #{tpu_custom_call.1} parent=0 // loop_footer
    %s15 = sadd.s32 1, %s11
  $region7: #{tpu_custom_call.1} parent=0 // loop_footer_branch
    %10 = sbr.rel target = $region3
  $region8: #{tpu_custom_call.1} parent=0 // loop_exit
    _

</llo_original>
